<compile_context>
chip_gen: v6e
topology: v6e:2x2x1
jax: 0.10.0
libtpu: 0.0.40
codegen_flags: <defaults>
</compile_context>

<pallas_src>
import functools

import jax
import jax.numpy as jnp
from jax.experimental import pallas as pl
from jax.experimental.pallas import tpu as pltpu


# ----------------------------- Pallas kernel --------------------------------
def _sdof_mlp_kernel(*refs, n_hidden_layers, scalar_gd, act_dtype):
    # Transposed layout: x_ref is [n_in, TB], weights are W^T, activations [H, TB].
    if scalar_gd:
        (x_ref, w_in_ref, b_in_ref, w_hid_ref, b_hid_ref,
         w_out_ref, b_out_ref, o_ref) = refs
        g_ref = d_ref = None
    else:
        (x_ref, g_ref, d_ref, w_in_ref, b_in_ref, w_hid_ref, b_hid_ref,
         w_out_ref, b_out_ref, o_ref) = refs

    n_in = x_ref.shape[0]
    x = x_ref[...]
    if n_in == 1:
        # K=1 contraction -> outer product on the VPU (skip the MXU entirely).
        z0 = w_in_ref[...] * x + b_in_ref[...]            # [H,1]*[1,TB] + [H,1]
    else:
        z0 = (jnp.dot(w_in_ref[...], x, preferred_element_type=jnp.float32)
              + b_in_ref[...])
    h = jnp.tanh(z0.astype(act_dtype))                    # tanh in act_dtype (bf16 on v6e/v7x)

    # Hidden layers (static unroll; n_hidden_layers = N_LAYERS - 1)
    for l in range(n_hidden_layers):
        z = (jnp.dot(w_hid_ref[l], h, preferred_element_type=jnp.float32)
             + b_hid_ref[l])
        h = jnp.tanh(z.astype(act_dtype))

    # Output layer (no activation): [n_out, H] @ [H, TB] -> [n_out, TB]
    out = (jnp.dot(w_out_ref[...], h, preferred_element_type=jnp.float32)
           + b_out_ref[...])

    if scalar_gd:
        # G / D already folded into w_out / b_out in the wrapper.
        o_ref[...] = out
    else:
        o_ref[...] = g_ref[...] + d_ref[...] * out


# ------------------------------ Wrapper --------------------------------------
def _round_up(a, m):
    return (a + m - 1) // m * m


def _default_act_dtype():
    """bf16 activations on v6e/v7x (bf16 EUP/VPU); f32 on v5e and older / non-TPU."""
    try:
        kind = jax.devices()[0].device_kind.lower()
    except Exception:
        return jnp.float32
    if ("v6" in kind) or ("v7" in kind):
        return jnp.bfloat16
    return jnp.float32


def sdof_pinn_ss_forward_T(xT, G, D, params, *, tile_b=2048, activation_dtype=None):
    """Transposed forward pass.

    xT: [n_in, B] float32 (batch on the lane axis).  Returns yT: [n_out, B].
    G, D follow PyTorch semantics: scalars or arrays broadcastable to [B, n_out].
    """
    w_in, b_in, w_hid, b_hid, w_out, b_out = params
    xT = jnp.asarray(xT, jnp.float32)
    n_in, B = xT.shape
    n_hidden = w_in.shape[1]
    n_out = w_out.shape[1]
    n_hidden_layers = w_hid.shape[0]

    if activation_dtype is None:
        activation_dtype = _default_act_dtype()

    # ----- batch tile selection: big lane-dense tiles, but >= 2 grid steps when the
    # (128-padded) batch allows it (keeps both v7x TensorCores busy). --------------
    tile_req = _round_up(max(int(tile_b), 128), 128)
    B_128 = _round_up(B, 128)
    two_step_tile = _round_up(-(-B_128 // 2), 128)      # ceil(B_128/2) up to 128
    tile = max(128, min(tile_req, two_step_tile))
    B_pad = _round_up(B, tile)
    grid = (B_pad // tile,)

    # Pad the already-transposed batch (single pad op; padded cols sliced off below).
    if B_pad != B:
        xT = jnp.pad(xT, ((0, 0), (0, B_pad - B)))

    # ----- kernel-layout weights: W^T, column biases ------------------------------
    w_in_t = jnp.asarray(w_in, jnp.float32).T                      # [H, n_in]
    b_in_c = jnp.asarray(b_in, jnp.float32).reshape(n_hidden, 1)   # [H, 1]
    w_hid_t = jnp.swapaxes(jnp.asarray(w_hid, jnp.float32), 1, 2)  # [L-1, H, H]
    b_hid_c = jnp.swapaxes(jnp.asarray(b_hid, jnp.float32), 1, 2)  # [L-1, H, 1]
    w_out_t = jnp.asarray(w_out, jnp.float32).T                    # [n_out, H]
    b_out_c = jnp.asarray(b_out, jnp.float32).reshape(n_out, 1)    # [n_out, 1]

    G = jnp.asarray(G, jnp.float32)
    D = jnp.asarray(D, jnp.float32)
    scalar_gd = (G.size == 1) and (D.size == 1)

    if scalar_gd:
        # Fold y = G + D * net(x) into the output layer (done once on tiny constants).
        d_s = D.reshape(())
        g_s = G.reshape(())
        w_out_t = d_s * w_out_t
        b_out_c = d_s * b_out_c + g_s

    # MXU-fed weights in the activation dtype (bf16 on v6e/v7x); biases stay f32.
    w_hid_k = w_hid_t.astype(activation_dtype)
    w_out_k = w_out_t.astype(activation_dtype)

    # ----- build args / specs ------------------------------------------------------
    args = [xT]
    in_specs = [pl.BlockSpec((n_in, tile), lambda i: (0, i))]

    if not scalar_gd:
        def _prep(a):
            # Exact NumPy/PyTorch broadcasting to [B, n_out], then lane-dense transpose.
            a = jnp.broadcast_to(jnp.asarray(a, jnp.float32), (B, n_out)).T  # [n_out, B]
            if B_pad != B:
                a = jnp.pad(a, ((0, 0), (0, B_pad - B)))
            return a
        args += [_prep(G), _prep(D)]
        in_specs += [pl.BlockSpec((n_out, tile), lambda i: (0, i)),
                     pl.BlockSpec((n_out, tile), lambda i: (0, i))]

    args += [w_in_t, b_in_c, w_hid_k, b_hid_c, w_out_k, b_out_c]
    in_specs += [
        pl.BlockSpec((n_hidden, n_in), lambda i: (0, 0)),                   # w_in^T
        pl.BlockSpec((n_hidden, 1), lambda i: (0, 0)),                      # b_in
        pl.BlockSpec((n_hidden_layers, n_hidden, n_hidden),
                     lambda i: (0, 0, 0)),                                  # w_hid^T
        pl.BlockSpec((n_hidden_layers, n_hidden, 1), lambda i: (0, 0, 0)),  # b_hid
        pl.BlockSpec((n_out, n_hidden), lambda i: (0, 0)),                  # w_out^T
        pl.BlockSpec((n_out, 1), lambda i: (0, 0)),                         # b_out
    ]
    out_specs = pl.BlockSpec((n_out, tile), lambda i: (0, i))

    # Declared scoped-VMEM limit so large tiles don't trip the 16/32 MiB defaults.
    weight_bytes = 4 * (n_hidden * (n_in + 1)
                        + n_hidden_layers * n_hidden * (n_hidden + 1)
                        + n_out * (n_hidden + 1))
    act_bytes = 4 * n_hidden * tile                                   # one live [H, TB] slab
    io_bytes = 4 * tile * (n_in + n_out + (0 if scalar_gd else 2 * n_out))
    vmem_limit = int(min(48 * 2**20,
                         max(32 * 2**20,
                             2 * (weight_bytes + 8 * act_bytes + 2 * io_bytes))))

    kernel = functools.partial(_sdof_mlp_kernel,
                               n_hidden_layers=n_hidden_layers,
                               scalar_gd=scalar_gd,
                               act_dtype=activation_dtype)

    yT = pl.pallas_call(
        kernel,
        out_shape=jax.ShapeDtypeStruct((n_out, B_pad), jnp.float32),
        grid_spec=pltpu.PrefetchScalarGridSpec(
            num_scalar_prefetch=0,
            grid=grid,
            in_specs=in_specs,
            out_specs=out_specs,
        ),
        compiler_params=pltpu.CompilerParams(
            dimension_semantics=("parallel",),
            vmem_limit_bytes=vmem_limit),
    )(*args)

    return yT[:, :B]


def sdof_pinn_ss_forward(x, G, D, params, *, tile_b=2048, activation_dtype=None):
    """PyTorch-convention forward. x: [B, n_in]; returns [B, n_out]."""
    x = jnp.asarray(x, jnp.float32)
    yT = sdof_pinn_ss_forward_T(x.T, G, D, params,
                                tile_b=tile_b, activation_dtype=activation_dtype)
    return yT.T


# --------------------------- Parameter init -----------------------------------
def init_params(key, n_input, n_output, n_hidden, n_layers):
    """Deterministic synthetic parameters matching the module's shapes.

    Weights are stored (in_features, out_features); biases as (1, out_features).
    Hidden-layer weights stacked along a leading axis of size n_layers - 1.
    """
    k = jax.random.split(key, 6)
    scale = 0.1
    w_in = scale * jax.random.normal(k[0], (n_input, n_hidden), jnp.float32)
    b_in = scale * jax.random.normal(k[1], (1, n_hidden), jnp.float32)
    w_hid = scale * jax.random.normal(
        k[2], (n_layers - 1, n_hidden, n_hidden), jnp.float32)
    b_hid = scale * jax.random.normal(
        k[3], (n_layers - 1, 1, n_hidden), jnp.float32)
    w_out = scale * jax.random.normal(k[4], (n_hidden, n_output), jnp.float32)
    b_out = scale * jax.random.normal(k[5], (1, n_output), jnp.float32)
    return (w_in, b_in, w_hid, b_hid, w_out, b_out)


# Pure-JAX reference (for a built-in correctness check).
def reference_forward(x, G, D, params):
    w_in, b_in, w_hid, b_hid, w_out, b_out = params
    h = jnp.tanh(x @ w_in + b_in)
    for l in range(w_hid.shape[0]):
        h = jnp.tanh(h @ w_hid[l] + b_hid[l])
    out = h @ w_out + b_out
    return G + D * out


# TODO(synk): calc_residuals / loss_func use torch.autograd time-derivatives and are not
# part of the forward pass; they are not implemented here.

if __name__ == "__main__":
    # SDOF state-space PINN: scalar time input, 2-state output (disp, vel).
    N_INPUT, N_OUTPUT, N_HIDDEN, N_LAYERS = 1, 2, 32, 3

    key = jax.random.PRNGKey(0)
    kx, kx2, kp = jax.random.split(key, 3)
    params = init_params(kp, N_INPUT, N_OUTPUT, N_HIDDEN, N_LAYERS)

    f32 = jnp.float32

    # --- 1) small batch, default scalar BCs (G=0, D=1), f32 activations ----------
    B = 16
    x = jax.random.uniform(kx, (B, N_INPUT), jnp.float32)
    y = jax.block_until_ready(
        sdof_pinn_ss_forward(x, jnp.float32(0.0), jnp.float32(1.0), params,
                             activation_dtype=f32))
    y_ref = reference_forward(x, jnp.float32(0.0), jnp.float32(1.0), params)
    assert y.shape == (B, N_OUTPUT)
    assert jnp.allclose(y, y_ref, atol=1e-5, rtol=1e-5), "scalar-BC (default) mismatch"

    # --- 2) non-trivial scalar BCs exercise the fold W'=D*W, b'=D*b+G -------------
    y1 = jax.block_until_ready(
        sdof_pinn_ss_forward(x, jnp.float32(0.3), jnp.float32(2.0), params,
                             activation_dtype=f32))
    y1_ref = reference_forward(x, jnp.float32(0.3), jnp.float32(2.0), params)
    assert jnp.allclose(y1, y1_ref, atol=1e-5, rtol=1e-5), "scalar-BC (folded) mismatch"

    # --- 3) hard-BC per-row mask [B, n_out] (array G/D path) ----------------------
    D_hard = jnp.concatenate(
        [jnp.zeros((1, N_OUTPUT), jnp.float32),
         jnp.ones((B - 1, N_OUTPUT), jnp.float32)], axis=0)
    y2 = jax.block_until_ready(
        sdof_pinn_ss_forward(x, jnp.float32(0.0), D_hard, params, activation_dtype=f32))
    y2_ref = reference_forward(x, jnp.float32(0.0), D_hard, params)
    assert jnp.allclose(y2, y2_ref, atol=1e-5, rtol=1e-5), "hard-BC mismatch"

    # --- 4) 1-D per-output D of shape (n_out,) exercises fixed broadcasting -------
    D_vec = jnp.array([0.5, 2.0], jnp.float32)
    y3 = jax.block_until_ready(
        sdof_pinn_ss_forward(x, jnp.float32(0.1), D_vec, params, activation_dtype=f32))
    y3_ref = reference_forward(x, jnp.float32(0.1), D_vec, params)
    assert jnp.allclose(y3, y3_ref, atol=1e-5, rtol=1e-5), "per-output-D mismatch"

    # --- 5) larger ragged batch: >=2 grid steps, padding, transposed API,
    #        auto activation dtype (bf16 on v6e/v7x, f32 elsewhere) ----------------
    B2 = 300
    x2 = jax.random.uniform(kx2, (B2, N_INPUT), jnp.float32)
    y4T = jax.block_until_ready(
        sdof_pinn_ss_forward_T(x2.T, jnp.float32(0.0), jnp.float32(1.0), params,
                               activation_dtype=None))
    y4_ref = reference_forward(x2, jnp.float32(0.0), jnp.float32(1.0), params)
    assert y4T.shape == (N_OUTPUT, B2)
    assert jnp.allclose(y4T.T, y4_ref, atol=5e-2, rtol=5e-2), "large-batch/auto-dtype mismatch"

    print("KERNEL_OK")
</pallas_src>

<mosaic_0001>
module attributes {stable_mosaic.version = 11 : i64} {
  func.func @_sdof_mlp_kernel(%arg0: i32, %arg1: memref<1x128xf32, #tpu.memory_space<vmem>>, %arg2: memref<32x1xf32, #tpu.memory_space<vmem>>, %arg3: memref<32x1xf32, #tpu.memory_space<vmem>>, %arg4: memref<2x32x32xf32, #tpu.memory_space<vmem>>, %arg5: memref<2x32x1xf32, #tpu.memory_space<vmem>>, %arg6: memref<2x32xf32, #tpu.memory_space<vmem>>, %arg7: memref<2x1xf32, #tpu.memory_space<vmem>>, %arg8: memref<2x128xf32, #tpu.memory_space<vmem>>) attributes {dimension_semantics = [#tpu.dimension_semantics<parallel>], iteration_bounds = array<i64: 1>, scalar_prefetch = 0 : i64, scratch_operands = 0 : i64, tpu.core_type = #tpu.core_type<tc>, window_params = [{transform_indices = @transform_0, window_bounds = array<i64: 1, 128>}, {pipeline_mode = #tpu.pipeline_mode<synchronous>, transform_indices = @transform_1, window_bounds = array<i64: 32, 1>}, {pipeline_mode = #tpu.pipeline_mode<synchronous>, transform_indices = @transform_2, window_bounds = array<i64: 32, 1>}, {pipeline_mode = #tpu.pipeline_mode<synchronous>, transform_indices = @transform_3, window_bounds = array<i64: 2, 32, 32>}, {pipeline_mode = #tpu.pipeline_mode<synchronous>, transform_indices = @transform_4, window_bounds = array<i64: 2, 32, 1>}, {pipeline_mode = #tpu.pipeline_mode<synchronous>, transform_indices = @transform_5, window_bounds = array<i64: 2, 32>}, {pipeline_mode = #tpu.pipeline_mode<synchronous>, transform_indices = @transform_6, window_bounds = array<i64: 2, 1>}, {transform_indices = @transform_7, window_bounds = array<i64: 2, 128>}]} {
    %c0 = arith.constant 0 : index
    %c0_0 = arith.constant 0 : index
    %0 = vector.load %arg1[%c0, %c0_0] : memref<1x128xf32, #tpu.memory_space<vmem>>, vector<1x128xf32>
    %c0_1 = arith.constant 0 : index
    %c0_2 = arith.constant 0 : index
    %1 = vector.load %arg2[%c0_1, %c0_2] : memref<32x1xf32, #tpu.memory_space<vmem>>, vector<32x1xf32>
    %2 = vector.broadcast %1 : vector<32x1xf32> to vector<32x128xf32>
    %3 = vector.broadcast %0 : vector<1x128xf32> to vector<32x128xf32>
    %4 = arith.mulf %2, %3 : vector<32x128xf32>
    %c0_3 = arith.constant 0 : index
    %c0_4 = arith.constant 0 : index
    %5 = vector.load %arg3[%c0_3, %c0_4] : memref<32x1xf32, #tpu.memory_space<vmem>>, vector<32x1xf32>
    %6 = vector.broadcast %5 : vector<32x1xf32> to vector<32x128xf32>
    %7 = arith.addf %4, %6 : vector<32x128xf32>
    %8 = math.tanh %7 : vector<32x128xf32>
    %c0_5 = arith.constant 0 : index
    %c0_6 = arith.constant 0 : index
    %c0_7 = arith.constant 0 : index
    %9 = vector.load %arg4[%c0_5, %c0_6, %c0_7] : memref<2x32x32xf32, #tpu.memory_space<vmem>>, vector<1x32x32xf32>
    %10 = vector.shape_cast %9 : vector<1x32x32xf32> to vector<32x32xf32>
    %cst = arith.constant dense<0.000000e+00> : vector<32x128xf32>
    %11 = tpu.matmul %10, %8, %cst {dimension_numbers = #tpu.dot_dimension_numbers<[1], [0], [0], [1], [0, 0, 1, 1], [], []>} : vector<32x32xf32>, vector<32x128xf32>, vector<32x128xf32> -> vector<32x128xf32>
    %c0_8 = arith.constant 0 : index
    %c0_9 = arith.constant 0 : index
    %c0_10 = arith.constant 0 : index
    %12 = vector.load %arg5[%c0_8, %c0_9, %c0_10] : memref<2x32x1xf32, #tpu.memory_space<vmem>>, vector<1x32x1xf32>
    %13 = vector.shape_cast %12 : vector<1x32x1xf32> to vector<32x1xf32>
    %14 = vector.broadcast %13 : vector<32x1xf32> to vector<32x128xf32>
    %15 = arith.addf %11, %14 : vector<32x128xf32>
    %16 = math.tanh %15 : vector<32x128xf32>
    %c1 = arith.constant 1 : index
    %c0_11 = arith.constant 0 : index
    %c0_12 = arith.constant 0 : index
    %17 = vector.load %arg4[%c1, %c0_11, %c0_12] : memref<2x32x32xf32, #tpu.memory_space<vmem>>, vector<1x32x32xf32>
    %18 = vector.shape_cast %17 : vector<1x32x32xf32> to vector<32x32xf32>
    %cst_13 = arith.constant dense<0.000000e+00> : vector<32x128xf32>
    %19 = tpu.matmul %18, %16, %cst_13 {dimension_numbers = #tpu.dot_dimension_numbers<[1], [0], [0], [1], [0, 0, 1, 1], [], []>} : vector<32x32xf32>, vector<32x128xf32>, vector<32x128xf32> -> vector<32x128xf32>
    %c1_14 = arith.constant 1 : index
    %c0_15 = arith.constant 0 : index
    %c0_16 = arith.constant 0 : index
    %20 = vector.load %arg5[%c1_14, %c0_15, %c0_16] : memref<2x32x1xf32, #tpu.memory_space<vmem>>, vector<1x32x1xf32>
    %21 = vector.shape_cast %20 : vector<1x32x1xf32> to vector<32x1xf32>
    %22 = vector.broadcast %21 : vector<32x1xf32> to vector<32x128xf32>
    %23 = arith.addf %19, %22 : vector<32x128xf32>
    %24 = math.tanh %23 : vector<32x128xf32>
    %c0_17 = arith.constant 0 : index
    %c0_18 = arith.constant 0 : index
    %25 = vector.load %arg6[%c0_17, %c0_18] : memref<2x32xf32, #tpu.memory_space<vmem>>, vector<2x32xf32>
    %cst_19 = arith.constant dense<0.000000e+00> : vector<2x128xf32>
    %26 = tpu.matmul %25, %24, %cst_19 {dimension_numbers = #tpu.dot_dimension_numbers<[1], [0], [0], [1], [0, 0, 1, 1], [], []>} : vector<2x32xf32>, vector<32x128xf32>, vector<2x128xf32> -> vector<2x128xf32>
    %c0_20 = arith.constant 0 : index
    %c0_21 = arith.constant 0 : index
    %27 = vector.load %arg7[%c0_20, %c0_21] : memref<2x1xf32, #tpu.memory_space<vmem>>, vector<2x1xf32>
    %28 = vector.broadcast %27 : vector<2x1xf32> to vector<2x128xf32>
    %29 = arith.addf %26, %28 : vector<2x128xf32>
    %c0_22 = arith.constant 0 : index
    %c0_23 = arith.constant 0 : index
    %30 = vector.load %arg8[%c0_22, %c0_23] : memref<2x128xf32, #tpu.memory_space<vmem>>, vector<2x128xf32>
    tpu.vector_store %arg8[%c0_22, %c0_23], %29 {strides = array<i32>} : memref<2x128xf32, #tpu.memory_space<vmem>>, vector<2x128xf32>,
    return
  }
  func.func @transform_0(%arg0: i32) -> (i32, i32) {
    %c0_i32 = arith.constant 0 : i32
    %c0_i32_0 = arith.constant 0 : i32
    return %c0_i32, %arg0 : i32, i32
  }
  func.func @transform_1(%arg0: i32) -> (i32, i32) {
    %c0_i32 = arith.constant 0 : i32
    %c0_i32_0 = arith.constant 0 : i32
    %c0_i32_1 = arith.constant 0 : i32
    return %c0_i32, %c0_i32_0 : i32, i32
  }
  func.func @transform_2(%arg0: i32) -> (i32, i32) {
    %c0_i32 = arith.constant 0 : i32
    %c0_i32_0 = arith.constant 0 : i32
    %c0_i32_1 = arith.constant 0 : i32
    return %c0_i32, %c0_i32_0 : i32, i32
  }
  func.func @transform_3(%arg0: i32) -> (i32, i32, i32) {
    %c0_i32 = arith.constant 0 : i32
    %c0_i32_0 = arith.constant 0 : i32
    %c0_i32_1 = arith.constant 0 : i32
    %c0_i32_2 = arith.constant 0 : i32
    return %c0_i32, %c0_i32_0, %c0_i32_1 : i32, i32, i32
  }
  func.func @transform_4(%arg0: i32) -> (i32, i32, i32) {
    %c0_i32 = arith.constant 0 : i32
    %c0_i32_0 = arith.constant 0 : i32
    %c0_i32_1 = arith.constant 0 : i32
    %c0_i32_2 = arith.constant 0 : i32
    return %c0_i32, %c0_i32_0, %c0_i32_1 : i32, i32, i32
  }
  func.func @transform_5(%arg0: i32) -> (i32, i32) {
    %c0_i32 = arith.constant 0 : i32
    %c0_i32_0 = arith.constant 0 : i32
    %c0_i32_1 = arith.constant 0 : i32
    return %c0_i32, %c0_i32_0 : i32, i32
  }
  func.func @transform_6(%arg0: i32) -> (i32, i32) {
    %c0_i32 = arith.constant 0 : i32
    %c0_i32_0 = arith.constant 0 : i32
    %c0_i32_1 = arith.constant 0 : i32
    return %c0_i32, %c0_i32_0 : i32, i32
  }
  func.func @transform_7(%arg0: i32) -> (i32, i32) {
    %c0_i32 = arith.constant 0 : i32
    %c0_i32_0 = arith.constant 0 : i32
    return %c0_i32, %arg0 : i32, i32
  }
}

</mosaic_0001>

<llo_original>
// kernel: tpu_custom_call.1
$region0: #{tpu_custom_call.1}
  #allocation0 [shape = 'u32[]', space=smem, size = 0x4, offset = 0x4, fixed_abs, tag = 'smem constant byte address 0x4 - core index']
  #allocation1 [shape = 'u32[144,128]{1,0:T(1,128)}', space=vmem, size = 0x12000, scoped, tag = 'internal scratch']
  %s0 = inlined_call_operand.vmem [shape: f32[1,128], index: 0, kind: input, shape index: {}]
  %s1 = inlined_call_operand.vmem [shape: f32[32,1], index: 1, kind: input, shape index: {}]
  %s2 = inlined_call_operand.vmem [shape: f32[32,1], index: 2, kind: input, shape index: {}]
  %s3 = inlined_call_operand.vmem [shape: f32[2,32,32], index: 3, kind: input, shape index: {}]
  %s4 = inlined_call_operand.vmem [shape: f32[2,32,1], index: 4, kind: input, shape index: {}]
  %s5 = inlined_call_operand.vmem [shape: f32[2,32], index: 5, kind: input, shape index: {}]
  %s6 = inlined_call_operand.vmem [shape: f32[2,1], index: 6, kind: input, shape index: {}]
  %s7 = inlined_call_operand.hbm [shape: f32[2,128], index: 7, kind: output, shape index: {}]
  %s8 = sld [smem:[#allocation0]]
  $region38: #{tpu_custom_call.1} parent=0
    _
  %s10 = ssub.s32 1, %s8
  %s11 = scalar_select 0, %s10, %s8
  $region1: #{tpu_custom_call.1} parent=0
    #allocation2 [shape = 'u8[1024]{0}', space=vmem, size = 0x400, scoped, tag = 'output window, operand 0, single buffered']
    #allocation3 [shape = 's32[1]{0}', space=sflag, size = 0x4, scoped, tag = 'scoped memory for tpu_custom_call.1']
    %12 = vsyncpa [#allocation3], 0
    // Predicated region
    $region2: #{tpu_custom_call.1} parent=1 // pred_check
      _
    $region3: #{tpu_custom_call.1} parent=1 // pred_check_branch
      %14 = sbr.rel (0) target = $region5
    $region4: #{tpu_custom_call.1} parent=1 // pred_region
      _
    $region5: #{tpu_custom_call.1} parent=1 // pred_fallthru
      _
    // Predicated region
    $region6: #{tpu_custom_call.1} parent=1 // pred_check
      _
    $region7: #{tpu_custom_call.1} parent=1 // pred_check_branch
      %16 = sbr.rel (0) target = $region9
    $region8: #{tpu_custom_call.1} parent=1 // pred_region
      _
    $region9: #{tpu_custom_call.1} parent=1 // pred_fallthru
      _
    // Predicated region
    $region10: #{tpu_custom_call.1} parent=1 // pred_check
      _
    $region11: #{tpu_custom_call.1} parent=1 // pred_check_branch
      %18 = sbr.rel (0) target = $region13
    $region12: #{tpu_custom_call.1} parent=1 // pred_region
      _
    $region13: #{tpu_custom_call.1} parent=1 // pred_fallthru
      _
    // Predicated region
    $region14: #{tpu_custom_call.1} parent=1 // pred_check
      _
    $region15: #{tpu_custom_call.1} parent=1 // pred_check_branch
      %20 = sbr.rel (0) target = $region17
    $region16: #{tpu_custom_call.1} parent=1 // pred_region
      _
    $region17: #{tpu_custom_call.1} parent=1 // pred_fallthru
      _
    // Predicated region
    $region18: #{tpu_custom_call.1} parent=1 // pred_check
      _
    $region19: #{tpu_custom_call.1} parent=1 // pred_check_branch
      %22 = sbr.rel (0) target = $region21
    $region20: #{tpu_custom_call.1} parent=1 // pred_region
      _
    $region21: #{tpu_custom_call.1} parent=1 // pred_fallthru
      _
    // Predicated region
    $region22: #{tpu_custom_call.1} parent=1 // pred_check
      _
    $region23: #{tpu_custom_call.1} parent=1 // pred_check_branch
      %24 = sbr.rel (0) target = $region25
    $region24: #{tpu_custom_call.1} parent=1 // pred_region
      _
    $region25: #{tpu_custom_call.1} parent=1 // pred_fallthru
      _
    // Predicated region
    $region26: #{tpu_custom_call.1} parent=1 // pred_check
      _
    $region27: #{tpu_custom_call.1} parent=1 // pred_check_branch
      %26 = sbr.rel (0) target = $region29
    $region28: #{tpu_custom_call.1} parent=1 // pred_region
      _
    $region29: #{tpu_custom_call.1} parent=1 // pred_fallthru
      _
    %v27 = vld [vmem:[%s0] sm:$0x1]
    %v28 = vld [vmem:[%s1] sm:$0xff]
    %v29 = vld [vmem:[%s1 + $0x8] sm:$0xff]
    %v30 = vld [vmem:[%s1 + $0x10] sm:$0xff]
    %v31 = vld [vmem:[%s1 + $0x18] sm:$0xff]
    %33 = vset.pattern.permute.xlu0 0
    %34 = vperm.xlu0 %33, %v28
    %v35 = vpop.permute.xlu0 %34
    %38 = vset.pattern.permute.xlu0 0
    %39 = vperm.xlu0 %38, %v29
    %v40 = vpop.permute.xlu0 %39
    %43 = vset.pattern.permute.xlu0 0
    %44 = vperm.xlu0 %43, %v30
    %v45 = vpop.permute.xlu0 %44
    %48 = vset.pattern.permute.xlu0 0
    %49 = vperm.xlu0 %48, %v31
    %v50 = vpop.permute.xlu0 %49
    %v53 = vlaneseq
    %v54 = vshrl.u32 %v53, 7
    %v55 = vsub.s32 0, %v54
    %v56 = vrot.slane %v27, %v55
    %v58 = vmul.f32 %v35, %v56
    %v59 = vmul.f32 %v40, %v56
    %v60 = vmul.f32 %v45, %v56
    %v61 = vmul.f32 %v50, %v56
    %v62 = vld [vmem:[%s2] sm:$0xff]
    %v63 = vld [vmem:[%s2 + $0x8] sm:$0xff]
    %v64 = vld [vmem:[%s2 + $0x10] sm:$0xff]
    %v65 = vld [vmem:[%s2 + $0x18] sm:$0xff]
    %67 = vset.pattern.permute.xlu0 0
    %68 = vperm.xlu0 %67, %v62
    %v69 = vpop.permute.xlu0 %68
    %72 = vset.pattern.permute.xlu0 0
    %73 = vperm.xlu0 %72, %v63
    %v74 = vpop.permute.xlu0 %73
    %77 = vset.pattern.permute.xlu0 0
    %78 = vperm.xlu0 %77, %v64
    %v79 = vpop.permute.xlu0 %78
    %82 = vset.pattern.permute.xlu0 0
    %83 = vperm.xlu0 %82, %v65
    %v84 = vpop.permute.xlu0 %83
    %v86 = vadd.f32 %v58, %v69
    %v87 = vadd.f32 %v59, %v74
    %v88 = vadd.f32 %v60, %v79
    %v89 = vadd.f32 %v61, %v84
    %v90 = vtanh.pop %v86
    %v91 = vtanh.pop %v87
    %v92 = vtanh.pop %v88
    %v93 = vtanh.pop %v89
    %v94 = vld [vmem:[%s3] sm:$0xff]
    %v95 = vld [vmem:[%s3 + $0x8] sm:$0xff]
    %v96 = vld [vmem:[%s3 + $0x10] sm:$0xff]
    %v97 = vld [vmem:[%s3 + $0x18] sm:$0xff]
    %v98 = vld [vmem:[%s4] sm:$0xff]
    %v99 = vld [vmem:[%s4 + $0x8] sm:$0xff]
    %v100 = vld [vmem:[%s4 + $0x10] sm:$0xff]
    %v101 = vld [vmem:[%s4 + $0x18] sm:$0xff]
    %103 = vset.pattern.permute.xlu0 0
    %104 = vperm.xlu0 %103, %v98
    %v105 = vpop.permute.xlu0 %104
    %108 = vset.pattern.permute.xlu0 0
    %109 = vperm.xlu0 %108, %v99
    %v110 = vpop.permute.xlu0 %109
    %113 = vset.pattern.permute.xlu0 0
    %114 = vperm.xlu0 %113, %v100
    %v115 = vpop.permute.xlu0 %114
    %118 = vset.pattern.permute.xlu0 0
    %119 = vperm.xlu0 %118, %v101
    %v120 = vpop.permute.xlu0 %119
    %vm122 = vcmask 261120
    %v124 = vsel %vm122, %v94, 0
    %v127 = vsel %vm122, %v95, 0
    %v130 = vsel %vm122, %v96, 0
    %v133 = vsel %vm122, %v97, 0
    %135 = vmatprep.subr.mxu0 0.0
    %136 = vmatpush1.msra.mxu0 0.0
    %137 = vmatprep.subr.mxu0 0.0
    %138 = vmatpush1.msra.mxu0 0.0
    %139 = vmatprep.subr.mxu0 0.0
    %140 = vmatpush1.msra.mxu0 0.0
    %141 = vmatprep.subr.mxu0 0.0
    %142 = vmatpush1.msra.mxu0 0.0
    %143 = vmatprep.subr.mxu0 0.0
    %144 = vmatpush1.msra.mxu0 0.0
    %145 = vmatprep.subr.mxu0 0.0
    %146 = vmatpush1.msra.mxu0 0.0
    %147 = vmatprep.subr.mxu0 0.0
    %148 = vmatpush1.msra.mxu0 0.0
    %149 = vmatprep.subr.mxu0 0.0
    %150 = vmatpush1.msra.mxu0 0.0
    %151 = vmatprep.subr.mxu0 0.0
    %152 = vmatpush1.msra.mxu0 0.0
    %153 = vmatprep.subr.mxu0 0.0
    %154 = vmatpush1.msra.mxu0 0.0
    %155 = vmatprep.subr.mxu0 0.0
    %156 = vmatpush1.msra.mxu0 0.0
    %157 = vmatprep.subr.mxu0 0.0
    %158 = vmatpush1.msra.mxu0 0.0
    %159 = vmatprep.subr.mxu0 0.0
    %160 = vmatpush1.msra.mxu0 %v93
    %161 = vmatprep.subr.mxu0 0.0
    %162 = vmatpush1.msra.mxu0 %v92
    %163 = vmatprep.subr.mxu0 0.0
    %164 = vmatpush1.msra.mxu0 %v91
    %165 = vmatprep.subr.mxu0 0.0
    %166 = vmatpush1.msra.mxu0 %v90
    %167 = vmatprep.subr.mxu0 0.0
    %168 = vmatpush2.msra.mxu0 0.0
    %169 = vmatprep.subr.mxu0 0.0
    %170 = vmatpush2.msra.mxu0 0.0
    %171 = vmatprep.subr.mxu0 0.0
    %172 = vmatpush2.msra.mxu0 0.0
    %173 = vmatprep.subr.mxu0 0.0
    %174 = vmatpush2.msra.mxu0 0.0
    %175 = vmatprep.subr.mxu0 0.0
    %176 = vmatpush2.msra.mxu0 0.0
    %177 = vmatprep.subr.mxu0 0.0
    %178 = vmatpush2.msra.mxu0 0.0
    %179 = vmatprep.subr.mxu0 0.0
    %180 = vmatpush2.msra.mxu0 0.0
    %181 = vmatprep.subr.mxu0 0.0
    %182 = vmatpush2.msra.mxu0 0.0
    %183 = vmatprep.subr.mxu0 0.0
    %184 = vmatpush2.msra.mxu0 0.0
    %185 = vmatprep.subr.mxu0 0.0
    %186 = vmatpush2.msra.mxu0 0.0
    %187 = vmatprep.subr.mxu0 0.0
    %188 = vmatpush2.msra.mxu0 0.0
    %189 = vmatprep.subr.mxu0 0.0
    %190 = vmatpush2.msra.mxu0 0.0
    %191 = vmatprep.subr.mxu0 0.0
    %192 = vmatpush2.msra.mxu0 0.0
    %193 = vmatprep.subr.mxu0 0.0
    %194 = vmatpush2.msra.mxu0 0.0
    %195 = vmatprep.subr.mxu0 0.0
    %196 = vmatpush2.msra.mxu0 0.0
    %197 = vmatprep.subr.mxu0 0.0
    %198 = vmatpush2.msra.mxu0 0.0
    %199 = vmatprep.mubr.f32.mxu0 0.0
    %200 = vmatmul.mubr.f32.gmra.mxu0 %v124
    %v201 = vpop.f32.mrf.mxu0
    %v202 = vadd.f32 %v105, %v201
    %v203 = vpop.f32.mrf.mxu0
    %204 = vmatprep.mubr.f32.mxu0 0.0
    %205 = vmatmul.mubr.f32.gmra.mxu0 %v127
    %v206 = vpop.f32.mrf.mxu0
    %v207 = vadd.f32 %v110, %v206
    %v208 = vpop.f32.mrf.mxu0
    %209 = vmatprep.mubr.f32.mxu0 0.0
    %210 = vmatmul.mubr.f32.gmra.mxu0 %v130
    %v211 = vpop.f32.mrf.mxu0
    %v212 = vadd.f32 %v115, %v211
    %v213 = vpop.f32.mrf.mxu0
    %214 = vmatprep.mubr.f32.mxu0 0.0
    %215 = vmatmul.mubr.f32.gmra.mxu0 %v133
    %v216 = vpop.f32.mrf.mxu0
    %v217 = vadd.f32 %v120, %v216
    %v218 = vpop.f32.mrf.mxu0
    %219 = vdwg.mxu0
    %v220 = vtanh.pop %v202
    %v221 = vtanh.pop %v207
    %v222 = vtanh.pop %v212
    %v223 = vtanh.pop %v217
    %s224 = scalar_lea.vmem %s3, 32
    %v225 = vld [vmem:[%s224] sm:$0xff]
    %v226 = vld [vmem:[%s224 + $0x8] sm:$0xff]
    %v227 = vld [vmem:[%s224 + $0x10] sm:$0xff]
    %v228 = vld [vmem:[%s224 + $0x18] sm:$0xff]
    %s229 = scalar_lea.vmem %s4, 32
    %v230 = vld [vmem:[%s229] sm:$0xff]
    %v231 = vld [vmem:[%s229 + $0x8] sm:$0xff]
    %v232 = vld [vmem:[%s229 + $0x10] sm:$0xff]
    %v233 = vld [vmem:[%s229 + $0x18] sm:$0xff]
    %235 = vset.pattern.permute.xlu0 0
    %236 = vperm.xlu0 %235, %v230
    %v237 = vpop.permute.xlu0 %236
    %240 = vset.pattern.permute.xlu0 0
    %241 = vperm.xlu0 %240, %v231
    %v242 = vpop.permute.xlu0 %241
    %245 = vset.pattern.permute.xlu0 0
    %246 = vperm.xlu0 %245, %v232
    %v247 = vpop.permute.xlu0 %246
    %250 = vset.pattern.permute.xlu0 0
    %251 = vperm.xlu0 %250, %v233
    %v252 = vpop.permute.xlu0 %251
    %v255 = vsel %vm122, %v225, 0
    %v258 = vsel %vm122, %v226, 0
    %v261 = vsel %vm122, %v227, 0
    %v264 = vsel %vm122, %v228, 0
    %266 = vmatprep.subr.mxu0 0.0
    %267 = vmatpush1.msra.mxu0 0.0
    %268 = vmatprep.subr.mxu0 0.0
    %269 = vmatpush1.msra.mxu0 0.0
    %270 = vmatprep.subr.mxu0 0.0
    %271 = vmatpush1.msra.mxu0 0.0
    %272 = vmatprep.subr.mxu0 0.0
    %273 = vmatpush1.msra.mxu0 0.0
    %274 = vmatprep.subr.mxu0 0.0
    %275 = vmatpush1.msra.mxu0 0.0
    %276 = vmatprep.subr.mxu0 0.0
    %277 = vmatpush1.msra.mxu0 0.0
    %278 = vmatprep.subr.mxu0 0.0
    %279 = vmatpush1.msra.mxu0 0.0
    %280 = vmatprep.subr.mxu0 0.0
    %281 = vmatpush1.msra.mxu0 0.0
    %282 = vmatprep.subr.mxu0 0.0
    %283 = vmatpush1.msra.mxu0 0.0
    %284 = vmatprep.subr.mxu0 0.0
    %285 = vmatpush1.msra.mxu0 0.0
    %286 = vmatprep.subr.mxu0 0.0
    %287 = vmatpush1.msra.mxu0 0.0
    %288 = vmatprep.subr.mxu0 0.0
    %289 = vmatpush1.msra.mxu0 0.0
    %290 = vmatprep.subr.mxu0 0.0
    %291 = vmatpush1.msra.mxu0 %v223
    %292 = vmatprep.subr.mxu0 0.0
    %293 = vmatpush1.msra.mxu0 %v222
    %294 = vmatprep.subr.mxu0 0.0
    %295 = vmatpush1.msra.mxu0 %v221
    %296 = vmatprep.subr.mxu0 0.0
    %297 = vmatpush1.msra.mxu0 %v220
    %298 = vmatprep.subr.mxu0 0.0
    %299 = vmatpush2.msra.mxu0 0.0
    %300 = vmatprep.subr.mxu0 0.0
    %301 = vmatpush2.msra.mxu0 0.0
    %302 = vmatprep.subr.mxu0 0.0
    %303 = vmatpush2.msra.mxu0 0.0
    %304 = vmatprep.subr.mxu0 0.0
    %305 = vmatpush2.msra.mxu0 0.0
    %306 = vmatprep.subr.mxu0 0.0
    %307 = vmatpush2.msra.mxu0 0.0
    %308 = vmatprep.subr.mxu0 0.0
    %309 = vmatpush2.msra.mxu0 0.0
    %310 = vmatprep.subr.mxu0 0.0
    %311 = vmatpush2.msra.mxu0 0.0
    %312 = vmatprep.subr.mxu0 0.0
    %313 = vmatpush2.msra.mxu0 0.0
    %314 = vmatprep.subr.mxu0 0.0
    %315 = vmatpush2.msra.mxu0 0.0
    %316 = vmatprep.subr.mxu0 0.0
    %317 = vmatpush2.msra.mxu0 0.0
    %318 = vmatprep.subr.mxu0 0.0
    %319 = vmatpush2.msra.mxu0 0.0
    %320 = vmatprep.subr.mxu0 0.0
    %321 = vmatpush2.msra.mxu0 0.0
    %322 = vmatprep.subr.mxu0 0.0
    %323 = vmatpush2.msra.mxu0 0.0
    %324 = vmatprep.subr.mxu0 0.0
    %325 = vmatpush2.msra.mxu0 0.0
    %326 = vmatprep.subr.mxu0 0.0
    %327 = vmatpush2.msra.mxu0 0.0
    %328 = vmatprep.subr.mxu0 0.0
    %329 = vmatpush2.msra.mxu0 0.0
    %330 = vmatprep.mubr.f32.mxu0 0.0
    %331 = vmatmul.mubr.f32.gmra.mxu0 %v255
    %v332 = vpop.f32.mrf.mxu0
    %v333 = vadd.f32 %v237, %v332
    %v334 = vpop.f32.mrf.mxu0
    %335 = vmatprep.mubr.f32.mxu0 0.0
    %336 = vmatmul.mubr.f32.gmra.mxu0 %v258
    %v337 = vpop.f32.mrf.mxu0
    %v338 = vadd.f32 %v242, %v337
    %v339 = vpop.f32.mrf.mxu0
    %340 = vmatprep.mubr.f32.mxu0 0.0
    %341 = vmatmul.mubr.f32.gmra.mxu0 %v261
    %v342 = vpop.f32.mrf.mxu0
    %v343 = vadd.f32 %v247, %v342
    %v344 = vpop.f32.mrf.mxu0
    %345 = vmatprep.mubr.f32.mxu0 0.0
    %346 = vmatmul.mubr.f32.gmra.mxu0 %v264
    %v347 = vpop.f32.mrf.mxu0
    %v348 = vadd.f32 %v252, %v347
    %v349 = vpop.f32.mrf.mxu0
    %350 = vdwg.mxu0
    %v351 = vtanh.pop %v333
    %v352 = vtanh.pop %v338
    %v353 = vtanh.pop %v343
    %v354 = vtanh.pop %v348
    %v355 = vld [vmem:[%s5] sm:$0x3]
    %v356 = vld [vmem:[%s6] sm:$0x3]
    %358 = vset.pattern.permute.xlu0 0
    %359 = vperm.xlu0 %358, %v356
    %v360 = vpop.permute.xlu0 %359
    %v363 = vsel %vm122, %v355, 0
    %365 = vmatprep.subr.mxu0 0.0
    %366 = vmatpush1.msra.mxu0 0.0
    %367 = vmatprep.subr.mxu0 0.0
    %368 = vmatpush1.msra.mxu0 0.0
    %369 = vmatprep.subr.mxu0 0.0
    %370 = vmatpush1.msra.mxu0 0.0
    %371 = vmatprep.subr.mxu0 0.0
    %372 = vmatpush1.msra.mxu0 0.0
    %373 = vmatprep.subr.mxu0 0.0
    %374 = vmatpush1.msra.mxu0 0.0
    %375 = vmatprep.subr.mxu0 0.0
    %376 = vmatpush1.msra.mxu0 0.0
    %377 = vmatprep.subr.mxu0 0.0
    %378 = vmatpush1.msra.mxu0 0.0
    %379 = vmatprep.subr.mxu0 0.0
    %380 = vmatpush1.msra.mxu0 0.0
    %381 = vmatprep.subr.mxu0 0.0
    %382 = vmatpush1.msra.mxu0 0.0
    %383 = vmatprep.subr.mxu0 0.0
    %384 = vmatpush1.msra.mxu0 0.0
    %385 = vmatprep.subr.mxu0 0.0
    %386 = vmatpush1.msra.mxu0 0.0
    %387 = vmatprep.subr.mxu0 0.0
    %388 = vmatpush1.msra.mxu0 0.0
    %389 = vmatprep.subr.mxu0 0.0
    %390 = vmatpush1.msra.mxu0 %v354
    %391 = vmatprep.subr.mxu0 0.0
    %392 = vmatpush1.msra.mxu0 %v353
    %393 = vmatprep.subr.mxu0 0.0
    %394 = vmatpush1.msra.mxu0 %v352
    %395 = vmatprep.subr.mxu0 0.0
    %396 = vmatpush1.msra.mxu0 %v351
    %397 = vmatprep.subr.mxu0 0.0
    %398 = vmatpush2.msra.mxu0 0.0
    %399 = vmatprep.subr.mxu0 0.0
    %400 = vmatpush2.msra.mxu0 0.0
    %401 = vmatprep.subr.mxu0 0.0
    %402 = vmatpush2.msra.mxu0 0.0
    %403 = vmatprep.subr.mxu0 0.0
    %404 = vmatpush2.msra.mxu0 0.0
    %405 = vmatprep.subr.mxu0 0.0
    %406 = vmatpush2.msra.mxu0 0.0
    %407 = vmatprep.subr.mxu0 0.0
    %408 = vmatpush2.msra.mxu0 0.0
    %409 = vmatprep.subr.mxu0 0.0
    %410 = vmatpush2.msra.mxu0 0.0
    %411 = vmatprep.subr.mxu0 0.0
    %412 = vmatpush2.msra.mxu0 0.0
    %413 = vmatprep.subr.mxu0 0.0
    %414 = vmatpush2.msra.mxu0 0.0
    %415 = vmatprep.subr.mxu0 0.0
    %416 = vmatpush2.msra.mxu0 0.0
    %417 = vmatprep.subr.mxu0 0.0
    %418 = vmatpush2.msra.mxu0 0.0
    %419 = vmatprep.subr.mxu0 0.0
    %420 = vmatpush2.msra.mxu0 0.0
    %421 = vmatprep.subr.mxu0 0.0
    %422 = vmatpush2.msra.mxu0 0.0
    %423 = vmatprep.subr.mxu0 0.0
    %424 = vmatpush2.msra.mxu0 0.0
    %425 = vmatprep.subr.mxu0 0.0
    %426 = vmatpush2.msra.mxu0 0.0
    %427 = vmatprep.subr.mxu0 0.0
    %428 = vmatpush2.msra.mxu0 0.0
    %429 = vmatprep.mubr.f32.mxu0 0.0
    %430 = vmatmul.mubr.f32.gmra.mxu0 %v363
    %v431 = vpop.f32.mrf.mxu0
    %v432 = vadd.f32 %v360, %v431
    %v433 = vpop.f32.mrf.mxu0
    %434 = vdwg.mxu0
    %435 = vst [vmem:[#allocation2] sm:$0x3] %v432
    // Predicated region
    $region30: #{tpu_custom_call.1} parent=1 // pred_check
      _
    $region31: #{tpu_custom_call.1} parent=1 // pred_check_branch
      %437 = sbr.rel (0) target = $region33
    $region32: #{tpu_custom_call.1} parent=1 // pred_region
      %s439 = ssub.s32 32, 32
      %440 = vsyncadd [#allocation3], %s439
      %s442 = sshll.u32 [#allocation2], 4
      %s443 = int_to_ptr.vmem [resolvable:$true] %s442
      %445 = dma.vmem_to_hbm [thread:$0]  %s443, 32, %s7, [#allocation3]
    $region33: #{tpu_custom_call.1} parent=1 // pred_fallthru
      _
    // Predicated region
    $region34: #{tpu_custom_call.1} parent=1 // pred_check
      _
    $region35: #{tpu_custom_call.1} parent=1 // pred_check_branch
      %447 = sbr.rel (0) target = $region37
    $region36: #{tpu_custom_call.1} parent=1 // pred_region
      %448 = dma.done [#allocation3], 32
    $region37: #{tpu_custom_call.1} parent=1 // pred_fallthru
      _
    %449 = vsyncpa [#allocation3], 1

</llo_original>
